<compile_context>
chip_gen: v7x
topology: tpu7x:2x2x1
jax: 0.10.0
libtpu: 0.0.40
codegen_flags: <defaults>
</compile_context>

<pallas_src>
import functools

import numpy as np
import jax
import jax.numpy as jnp
from jax.experimental import pallas as pl
from jax.experimental.pallas import tpu as pltpu


# --------------------------------------------------------------------------- #
# Capability probe: does pltpu.roll lower on this backend with jnp.roll
# semantics for a static sublane shift?  Falls back to aligned/value-slice taps
# if not (or if called under tracing, where the concrete compare would fail).
# --------------------------------------------------------------------------- #
@functools.lru_cache(maxsize=None)
def _sublane_roll_ok(dtype_name: str) -> bool:
    try:
        dt = jnp.dtype(dtype_name)
        rows = 16 if dt.itemsize >= 4 else 32
        x = jnp.arange(rows * 128, dtype=jnp.float32).reshape(rows, 128).astype(dt)

        def k(x_ref, o_ref):
            o_ref[...] = pltpu.roll(x_ref[...], shift=1, axis=0)

        got = pl.pallas_call(
            k, out_shape=jax.ShapeDtypeStruct((rows, 128), dt))(x)
        want = jnp.roll(x, 1, axis=0)
        return bool(jnp.array_equal(got.astype(jnp.float32),
                                    want.astype(jnp.float32)))
    except Exception:
        return False


# --------------------------------------------------------------------------- #
# Kernel body
# --------------------------------------------------------------------------- #
def _make_body(*, t_tile, pad, max_k, d_in, has_prev, nct_blocks, per_tap,
               use_roll):
    """Grid = (B, D_out tiles, T tiles).  Leading size-1 block dims indexed with [0].

    Channels-last blocks:  x_cur (1, t_tile, D_in), x_prev (1, pad, D_in)
    NCT blocks (layout fused in-kernel, XLU transpose):
                           x_cur (1, D_in, t_tile), x_prev (1, D_in, 128)
    Common:  w (max_k*D_in, tn)  tap-major combined causal filter
             b (1, tn)           combined bias (already the mean), f32
             out (1, t_tile, tn)
    """

    def body(*refs):
        if has_prev:
            x_cur_ref, x_prev_ref, w_ref, b_ref, out_ref = refs
        else:
            x_cur_ref, w_ref, b_ref, out_ref = refs

        # Current tile, channels-last, kept in the compute dtype (no f32 round trip:
        # bf16 halves the vld/vst traffic of the window build on v6e/v7x).
        if nct_blocks:
            cur = jnp.transpose(x_cur_ref[0])                 # (t_tile, D_in), XLU
        else:
            cur = x_cur_ref[0]                                # (t_tile, D_in)
        dt = cur.dtype

        # Causal halo: last `pad` timesteps of the previous T tile, zeroed at t == 0.
        if pad > 0:
            if has_prev:
                keep = (pl.program_id(2) > 0).astype(dt)
                if nct_blocks:
                    halo = jnp.transpose(x_prev_ref[0])[-pad:, :]   # (pad, D_in)
                else:
                    halo = x_prev_ref[0]                            # (pad, D_in)
                halo = halo * keep
            else:
                halo = jnp.zeros((pad, d_in), dt)
            x_win = jnp.concatenate([halo, cur], axis=0)      # (pad + t_tile, D_in)
        else:
            x_win = cur

        # Causal taps -> MXU.
        if per_tap:
            # One matmul per tap, f32 accumulation (MRB in-place accumulate on v7x).
            # Shifted taps via sublane rolls (XLU) / aligned slices; no im2col buffer.
            acc = jnp.dot(x_win[pad:pad + t_tile, :], w_ref[0:d_in, :],
                          preferred_element_type=jnp.float32)
            for s in range(1, max_k):
                if use_roll:
                    tap = pltpu.roll(x_win, shift=s, axis=0)[pad:pad + t_tile, :]
                else:
                    tap = x_win[pad - s: pad - s + t_tile, :]
                acc = acc + jnp.dot(tap, w_ref[s * d_in:(s + 1) * d_in, :],
                                    preferred_element_type=jnp.float32)
        else:
            # Small D_in: im2col into one matmul so the MXU K dim is max_k*D_in.
            if max_k > 1:
                cols = [x_win[pad - s: pad - s + t_tile, :] for s in range(max_k)]
                x_cols = jnp.concatenate(cols, axis=-1)       # (t_tile, max_k*D_in)
            else:
                x_cols = x_win
            acc = jnp.dot(x_cols, w_ref[...], preferred_element_type=jnp.float32)

        out_ref[0] = (acc + b_ref[0]).astype(out_ref.dtype)

    return body


# --------------------------------------------------------------------------- #
# Wrapper
# --------------------------------------------------------------------------- #
def invariant_net_v2(x, weights, biases, kernels, *, t_tile=None, tn=None,
                     compute_dtype=jnp.float32, out_dtype=jnp.float32):
    """x: (B, D_in, T) (PyTorch NCT).  Returns (B, T, D_out) in out_dtype."""
    B, D_in, T = x.shape
    D_out = weights[0].shape[0]
    n_k = len(kernels)
    max_k = int(max(kernels))
    halo_rows = max_k - 1
    pad = ((halo_rows + 7) // 8) * 8 if halo_rows > 0 else 0
    if pad > 128:
        raise ValueError("kernel sizes > 129 are not supported by the halo scheme")

    isz = jnp.dtype(compute_dtype).itemsize
    osz = jnp.dtype(out_dtype).itemsize

    # ---- fold every Conv1d + the mean + the biases into ONE causal filter --------
    # W_comb[s, i, o] = (1/n) * sum_{k > s} W_k[o, i, k-1-s];  b_comb = mean_k b_k.
    # D_out is lane-padded to a multiple of 128 so output stores are lane-dense.
    D_out_pad = ((D_out + 127) // 128) * 128
    w_acc = jnp.zeros((max_k, D_in, D_out), jnp.float32)
    for w, k in zip(weights, kernels):
        w_s = jnp.transpose(w.astype(jnp.float32), (2, 1, 0))[::-1]   # shift-major
        w_acc = w_acc.at[:k].add(w_s)
    w_acc = w_acc / n_k
    if D_out_pad != D_out:
        w_acc = jnp.pad(w_acc, ((0, 0), (0, 0), (0, D_out_pad - D_out)))
    w_flat = w_acc.reshape(max_k * D_in, D_out_pad).astype(compute_dtype)
    b_comb = jnp.stack([b.astype(jnp.float32) for b in biases]).mean(axis=0)
    if D_out_pad != D_out:
        b_comb = jnp.pad(b_comb, (0, D_out_pad - D_out))
    b_comb = b_comb.reshape(1, D_out_pad)

    # ---- generation-aware VMEM capacity -------------------------------------------
    try:
        vmem_cap = int(pltpu.get_tpu_info().vmem_capacity_bytes)
    except Exception:
        vmem_cap = 64 * 1024 * 1024          # conservative (v7x per-core)

    # ---- D_out tile (new grid axis; weight stays resident across the T sweep) -----
    if tn is None:
        tn = 128
        for cand in (256,):
            if (D_out_pad % cand == 0
                    and 2 * max_k * D_in * cand * isz <= vmem_cap // 4):
                tn = cand
                break
        tn = min(tn, D_out_pad)
    if D_out_pad % tn != 0 or tn % 128 != 0:
        raise ValueError(f"tn={tn} must be a multiple of 128 dividing {D_out_pad}")
    n_out = D_out_pad // tn

    per_tap = D_in >= 128          # per-tap matmuls when K=D_in already fills the MXU

    def _vmem_estimate(tt, nct):
        """Per-step working set: double-buffered blocks + in-kernel intermediates."""
        halo_blk = 0
        if pad > 0 and (T // tt) > 1:
            halo_blk = (D_in * 128 * isz) if nct else (pad * D_in * isz)
        dbl = 2 * (tt * D_in * isz + halo_blk + max_k * D_in * tn * isz
                   + tn * 4 + tt * tn * osz)
        inter = (pad + tt) * D_in * isz                       # x_win
        inter += (tt * D_in * isz) if per_tap else (tt * max_k * D_in * isz)
        inter += tt * tn * 4                                  # f32 accumulator
        if nct:
            inter += tt * D_in * isz                          # transposed tile
        return dbl + inter

    # ---- T tile: biggest preference that divides T and fits the VMEM budget -------
    if t_tile is None:
        prefs = ((256, 512, 128, 64, 32, 16, 8) if vmem_cap <= 96 * 2 ** 20
                 else (512, 256, 128, 64, 32, 16, 8))
        budget = int(0.6 * vmem_cap)
        valid = [c for c in prefs
                 if c <= T and T % c == 0 and (pad == 0 or c % pad == 0)]
        t_tile = next(
            (c for c in valid
             if _vmem_estimate(c, D_in % 8 == 0 and c % 128 == 0) <= budget),
            valid[-1] if valid else T)

    if T % t_tile != 0:
        raise ValueError(f"t_tile={t_tile} must divide T={T}")
    if t_tile != T and t_tile % 8 != 0:
        raise ValueError("t_tile must be a multiple of 8 (or equal to T)")
    n_t = T // t_tile
    has_prev = (pad > 0) and (n_t > 1)
    # Fused NCT path (no wrapper relayout) only for MXU/lane-aligned shapes.
    nct_blocks = (D_in % 8 == 0) and (t_tile % 128 == 0)
    if has_prev and not nct_blocks and t_tile % pad != 0:
        raise ValueError(f"t_tile={t_tile} must be a multiple of the halo pad={pad}")

    # ---- BlockSpecs -----------------------------------------------------------------
    if nct_blocks:
        x_arg = x.astype(compute_dtype)                       # (B, D_in, T), no relayout
        in_specs = [pl.BlockSpec((1, D_in, t_tile), lambda b, o, t: (b, 0, t))]
        args = [x_arg]
        if has_prev:
            lane_ratio = t_tile // 128
            in_specs.append(pl.BlockSpec(
                (1, D_in, 128),
                lambda b, o, t: (b, 0, jnp.maximum(t * lane_ratio - 1, 0))))
            args.append(x_arg)
    else:
        # Fallback: channels-last relayout in the wrapper (one extra XLA pass over x).
        x_btd = jnp.transpose(x, (0, 2, 1)).astype(compute_dtype)   # (B, T, D_in)
        in_specs = [pl.BlockSpec((1, t_tile, D_in), lambda b, o, t: (b, t, 0))]
        args = [x_btd]
        if has_prev:
            ratio = t_tile // pad
            in_specs.append(pl.BlockSpec(
                (1, pad, D_in),
                lambda b, o, t: (b, jnp.maximum(t * ratio - 1, 0), 0)))
            args.append(x_btd)

    in_specs += [
        pl.BlockSpec((max_k * D_in, tn), lambda b, o, t: (0, o)),
        pl.BlockSpec((1, tn), lambda b, o, t: (0, o)),
    ]
    args += [w_flat, b_comb]
    out_spec = pl.BlockSpec((1, t_tile, tn), lambda b, o, t: (b, t, o))

    est = _vmem_estimate(t_tile, nct_blocks)
    vmem_limit = int(min(int(0.75 * vmem_cap), max(16 * 2 ** 20, int(1.5 * est))))

    cost = pl.CostEstimate(
        flops=2 * B * T * max_k * D_in * D_out_pad,
        transcendentals=0,
        bytes_accessed=int(B * T * D_in * isz * n_out
                           + max_k * D_in * D_out_pad * isz
                           + B * T * D_out_pad * osz))

    use_roll = per_tap and max_k > 1 and _sublane_roll_ok(
        jnp.dtype(compute_dtype).name)
    body = _make_body(t_tile=t_tile, pad=pad, max_k=max_k, d_in=D_in,
                      has_prev=has_prev, nct_blocks=nct_blocks,
                      per_tap=per_tap, use_roll=use_roll)

    out = pl.pallas_call(
        body,
        out_shape=jax.ShapeDtypeStruct((B, T, D_out_pad), out_dtype),
        grid=(B, n_out, n_t),
        in_specs=in_specs,
        out_specs=out_spec,
        compiler_params=pltpu.CompilerParams(
            dimension_semantics=("parallel", "parallel", "parallel"),
            vmem_limit_bytes=vmem_limit),
        cost_estimate=cost,
    )(*args)

    if D_out_pad != D_out:
        out = out[:, :, :D_out]
    return out


# --------------------------------------------------------------------------- #
# Pure-JAX reference (replica of the PyTorch forward) for verification
# --------------------------------------------------------------------------- #
def reference(x, weights, biases, kernels):
    outs = []
    for w, b, k in zip(weights, biases, kernels):
        x_p = jnp.pad(x, ((0, 0), (0, 0), (k - 1, k - 1)))    # padding=k-1 both sides
        o = jax.lax.conv_general_dilated(
            x_p, w, window_strides=(1,), padding="VALID",
            dimension_numbers=("NCH", "OIH", "NCH"))
        o = o + b[None, :, None]
        if k != 1:
            o = o[..., : -(k - 1)]
        outs.append(jnp.transpose(o, (0, 2, 1)))
    return jnp.mean(jnp.stack(outs, 0), axis=0)


if __name__ == "__main__":
    key = jax.random.PRNGKey(0)

    def make_params(key, d_in, d_out, kernels):
        weights, biases = [], []
        for k in kernels:
            key, kw, kb = jax.random.split(key, 3)
            bound = 1.0 / np.sqrt(d_in * k)
            weights.append(jax.random.uniform(
                kw, (d_out, d_in, k), minval=-bound, maxval=bound,
                dtype=jnp.float32))
            biases.append(jax.random.uniform(
                kb, (d_out,), minval=-bound, maxval=bound, dtype=jnp.float32))
        return key, weights, biases

    kernels = [1, 3, 5]

    # ---- 1) small PyTorch-like shapes: channels-last fallback + im2col path -------
    B, D_in, D_out, T = 2, 4, 8, 16
    key, kx = jax.random.split(key)
    x = jax.random.normal(kx, (B, D_in, T), dtype=jnp.float32)
    key, weights, biases = make_params(key, D_in, D_out, kernels)
    ref = jax.block_until_ready(reference(x, weights, biases, kernels))

    # Multi-tile: exercises the cross-tile halo block + first-tile zero mask +
    # D_out lane padding (8 -> 128) with post-slice.
    out = jax.block_until_ready(
        invariant_net_v2(x, weights, biases, kernels, t_tile=8))
    np.testing.assert_allclose(np.asarray(out), np.asarray(ref), rtol=1e-5, atol=1e-5)

    # Auto tile (single T tile): halo synthesized as zeros in-kernel.
    out1 = jax.block_until_ready(invariant_net_v2(x, weights, biases, kernels))
    np.testing.assert_allclose(np.asarray(out1), np.asarray(ref), rtol=1e-5, atol=1e-5)

    # bf16 shuffle + matmul inputs, f32 accumulate (recommended on v6e/v7x).
    out_bf16 = jax.block_until_ready(
        invariant_net_v2(x, weights, biases, kernels, t_tile=8,
                         compute_dtype=jnp.bfloat16))
    np.testing.assert_allclose(np.asarray(out_bf16), np.asarray(ref),
                               rtol=1e-1, atol=1e-1)

    # ---- 2) MXU-aligned shapes: NCT blocks + in-kernel transpose, per-tap matmuls,
    #         cross-tile halo via a 128-lane block, D_out tiled over the grid --------
    B2, D_in2, D_out2, T2 = 2, 128, 256, 256
    key, kx2 = jax.random.split(key)
    x2 = jax.random.normal(kx2, (B2, D_in2, T2), dtype=jnp.float32)
    key, weights2, biases2 = make_params(key, D_in2, D_out2, kernels)
    ref2 = jax.block_until_ready(reference(x2, weights2, biases2, kernels))

    out2 = jax.block_until_ready(
        invariant_net_v2(x2, weights2, biases2, kernels, t_tile=128, tn=128))
    np.testing.assert_allclose(np.asarray(out2), np.asarray(ref2),
                               rtol=2e-2, atol=2e-2)

    print("KERNEL_OK")
</pallas_src>

<mosaic_0001>
module attributes {stable_mosaic.version = 11 : i64} {
  func.func @body(%arg0: i32, %arg1: i32, %arg2: i32, %arg3: memref<1x8x4xf32, #tpu.memory_space<vmem>>, %arg4: memref<1x8x4xf32, #tpu.memory_space<vmem>>, %arg5: memref<20x128xf32, #tpu.memory_space<vmem>>, %arg6: memref<1x128xf32, #tpu.memory_space<vmem>>, %arg7: memref<1x8x128xf32, #tpu.memory_space<vmem>>) attributes {dimension_semantics = [#tpu.dimension_semantics<parallel>, #tpu.dimension_semantics<parallel>, #tpu.dimension_semantics<parallel>], iteration_bounds = array<i64: 2, 1, 2>, scalar_prefetch = 0 : i64, scratch_operands = 0 : i64, tpu.core_type = #tpu.core_type<tc>, window_params = [{transform_indices = @transform_0, window_bounds = array<i64: 1, 8, 4>}, {transform_indices = @transform_1, window_bounds = array<i64: 1, 8, 4>}, {transform_indices = @transform_2, window_bounds = array<i64: 20, 128>}, {transform_indices = @transform_3, window_bounds = array<i64: 1, 128>}, {transform_indices = @transform_4, window_bounds = array<i64: 1, 8, 128>}]} {
    %c0 = arith.constant 0 : index
    %c0_0 = arith.constant 0 : index
    %c0_1 = arith.constant 0 : index
    %0 = vector.load %arg3[%c0, %c0_0, %c0_1] : memref<1x8x4xf32, #tpu.memory_space<vmem>>, vector<1x8x4xf32>
    %1 = vector.shape_cast %0 : vector<1x8x4xf32> to vector<8x4xf32>
    %c0_i32 = arith.constant 0 : i32
    %2 = arith.cmpi sgt, %arg2, %c0_i32 : i32
    %3 = arith.extui %2 : i1 to i32
    %4 = arith.sitofp %3 : i32 to f32
    %c0_2 = arith.constant 0 : index
    %c0_3 = arith.constant 0 : index
    %c0_4 = arith.constant 0 : index
    %5 = vector.load %arg4[%c0_2, %c0_3, %c0_4] : memref<1x8x4xf32, #tpu.memory_space<vmem>>, vector<1x8x4xf32>
    %6 = vector.shape_cast %5 : vector<1x8x4xf32> to vector<8x4xf32>
    %7 = vector.broadcast %4 : f32 to vector<8x4xf32>
    %8 = arith.mulf %6, %7 : vector<8x4xf32>
    %9 = tpu.concatenate %8, %1 in 0 : vector<8x4xf32>, vector<8x4xf32> -> vector<16x4xf32>
    %10 = vector.extract_strided_slice %9 {offsets = [8, 0], sizes = [8, 4], strides = [1, 1]} : vector<16x4xf32> to vector<8x4xf32>
    %11 = vector.extract_strided_slice %9 {offsets = [7, 0], sizes = [8, 4], strides = [1, 1]} : vector<16x4xf32> to vector<8x4xf32>
    %12 = vector.extract_strided_slice %9 {offsets = [6, 0], sizes = [8, 4], strides = [1, 1]} : vector<16x4xf32> to vector<8x4xf32>
    %13 = vector.extract_strided_slice %9 {offsets = [5, 0], sizes = [8, 4], strides = [1, 1]} : vector<16x4xf32> to vector<8x4xf32>
    %14 = vector.extract_strided_slice %9 {offsets = [4, 0], sizes = [8, 4], strides = [1, 1]} : vector<16x4xf32> to vector<8x4xf32>
    %15 = tpu.concatenate %10, %11, %12, %13, %14 in 1 : vector<8x4xf32>, vector<8x4xf32>, vector<8x4xf32>, vector<8x4xf32>, vector<8x4xf32> -> vector<8x20xf32>
    %c0_5 = arith.constant 0 : index
    %c0_6 = arith.constant 0 : index
    %16 = vector.load %arg5[%c0_5, %c0_6] : memref<20x128xf32, #tpu.memory_space<vmem>>, vector<20x128xf32>
    %cst = arith.constant dense<0.000000e+00> : vector<8x128xf32>
    %17 = tpu.matmul %15, %16, %cst {dimension_numbers = #tpu.dot_dimension_numbers<[1], [0], [0], [1], [0, 0, 1, 1], [], []>} : vector<8x20xf32>, vector<20x128xf32>, vector<8x128xf32> -> vector<8x128xf32>
    %c0_7 = arith.constant 0 : index
    %c0_8 = arith.constant 0 : index
    %18 = vector.load %arg6[%c0_7, %c0_8] : memref<1x128xf32, #tpu.memory_space<vmem>>, vector<1x128xf32>
    %19 = vector.shape_cast %18 : vector<1x128xf32> to vector<128xf32>
    %20 = vector.shape_cast %19 : vector<128xf32> to vector<1x128xf32>
    %21 = vector.broadcast %20 : vector<1x128xf32> to vector<8x128xf32>
    %22 = arith.addf %17, %21 : vector<8x128xf32>
    %c0_9 = arith.constant 0 : index
    %c0_10 = arith.constant 0 : index
    %c0_11 = arith.constant 0 : index
    %23 = vector.load %arg7[%c0_9, %c0_10, %c0_11] : memref<1x8x128xf32, #tpu.memory_space<vmem>>, vector<1x8x128xf32>
    %24 = vector.shape_cast %23 : vector<1x8x128xf32> to vector<8x128xf32>
    %25 = vector.shape_cast %22 : vector<8x128xf32> to vector<1x8x128xf32>
    tpu.vector_store %arg7[%c0_9, %c0_10, %c0_11], %25 {strides = array<i32>} : memref<1x8x128xf32, #tpu.memory_space<vmem>>, vector<1x8x128xf32>,
    return
  }
  func.func @transform_0(%arg0: i32, %arg1: i32, %arg2: i32) -> (i32, i32, i32) {
    %c0_i32 = arith.constant 0 : i32
    %c0_i32_0 = arith.constant 0 : i32
    return %arg0, %arg2, %c0_i32 : i32, i32, i32
  }
  func.func @transform_1(%arg0: i32, %arg1: i32, %arg2: i32) -> (i32, i32, i32) {
    %c1_i32 = arith.constant 1 : i32
    %0 = arith.muli %arg2, %c1_i32 : i32
    %c1_i32_0 = arith.constant 1 : i32
    %1 = arith.subi %0, %c1_i32_0 : i32
    %c0_i32 = arith.constant 0 : i32
    %2 = arith.maxsi %1, %c0_i32 : i32
    %c0_i32_1 = arith.constant 0 : i32
    %c0_i32_2 = arith.constant 0 : i32
    return %arg0, %2, %c0_i32_1 : i32, i32, i32
  }
  func.func @transform_2(%arg0: i32, %arg1: i32, %arg2: i32) -> (i32, i32) {
    %c0_i32 = arith.constant 0 : i32
    %c0_i32_0 = arith.constant 0 : i32
    return %c0_i32, %arg1 : i32, i32
  }
  func.func @transform_3(%arg0: i32, %arg1: i32, %arg2: i32) -> (i32, i32) {
    %c0_i32 = arith.constant 0 : i32
    %c0_i32_0 = arith.constant 0 : i32
    return %c0_i32, %arg1 : i32, i32
  }
  func.func @transform_4(%arg0: i32, %arg1: i32, %arg2: i32) -> (i32, i32, i32) {
    %c0_i32 = arith.constant 0 : i32
    return %arg0, %arg2, %arg1 : i32, i32, i32
  }
}

</mosaic_0001>

<llo_original>
// kernel: tpu_custom_call.1
$region0: #{tpu_custom_call.1}
  #allocation0 [shape = 'u32[]', space=smem, size = 0x4, offset = 0x4, fixed_abs, tag = 'smem constant byte address 0x4 - core index']
  #allocation1 [shape = 'u32[144,128]{1,0:T(1,128)}', space=vmem, size = 0x12000, scoped, tag = 'internal scratch']
  %s0 = inlined_call_operand.vmem [shape: f32[2,16,4], index: 0, kind: input, shape index: {}]
  %s1 = inlined_call_operand.vmem [shape: f32[2,16,4], index: 1, kind: input, shape index: {}]
  %s2 = inlined_call_operand.vmem [shape: f32[20,128], index: 2, kind: input, shape index: {}]
  %s3 = inlined_call_operand.vmem [shape: f32[1,128], index: 3, kind: input, shape index: {}]
  %s4 = inlined_call_operand.hbm [shape: f32[2,16,128], index: 4, kind: output, shape index: {}]
  %s5 = sld [smem:[#allocation0]]
  $region49: #{tpu_custom_call.1} parent=0
    _
  %s7 = ssub.s32 1, %s5
  %s8 = scalar_select 0, %s7, %s5
  $region1: #{tpu_custom_call.1} parent=0
    #allocation2 [shape = 'u8[8192]{0}', space=vmem, size = 0x2000, scoped, tag = 'output window, operand 0']
    #allocation3 [shape = 's32[2]{0}', space=sflag, size = 0x8, scoped, tag = 'scoped memory for tpu_custom_call.1']
    %9 = vsyncpa [#allocation3], 0
    %s10 = scalar_lea.sflag [#allocation3], 1
    %11 = vsyncpa %s10, 0
    loop: start=0, step=1, limit=6
    $region2: #{tpu_custom_call.1} parent=1 // loop_pre_header
      _
    $region3: #{tpu_custom_call.1} parent=1 // loop_header
      %s13 = sphi 0, %s17
      %p14 = scmp.ge.s32.totalorder %s13, 6
      %s20 = sphi 0, %s39
      %s21 = sphi 0, %s35
      %s22 = sphi 0, %s31
      %s23 = sphi 0, %s20
      %s24 = sphi 0, %s21
      %s25 = sphi 0, %s22
      %s26 = sphi 0, %s23
      %s27 = sphi 0, %s24
      %s28 = sphi 0, %s25
      %s44 = sphi 0, %s46
      %s47 = sphi 0, %s44
      %s48 = sphi 0, %s47
      %s64 = sphi 0, %s48
      %s78 = sphi 0, %s80
      %s81 = sphi 0, %s78
      %s82 = sphi 0, %s81
      %s98 = sphi 0, %s82
      %s104 = sphi 0, %s106
      %s107 = sphi 0, %s104
      %s108 = sphi 0, %s107
      %s124 = sphi 0, %s108
      %s130 = sphi 0, %s132
      %s133 = sphi 0, %s130
      %s134 = sphi 0, %s133
      %s150 = sphi 0, %s134
      %s160 = sphi 0, %s162
      %s163 = sphi 0, %s160
      %s164 = sphi 0, %s163
      %s180 = sphi 0, %s164
    $region4: #{tpu_custom_call.1} parent=1 // loop_header_branch
      %16 = sbr.rel (%p14) target = $region8
    $region5: #{tpu_custom_call.1} parent=1 // loop_body
      %s18 = ssub.s32 %s13, 1
      %s19 = ssub.s32 %s13, 2
      %s29 = sadd.s32 1, %s22
      %p30 = scmp.ge.s32.totalorder %s29, 2
      %s31 = scalar_select %p30, 0, %s29
      %s32 = sadd.s32 1, %s21
      %s33 = scalar_select %p30, %s32, %s21
      %p34 = scmp.ge.s32.totalorder %s33, 1
      %s35 = scalar_select %p34, 0, %s33
      %s36 = sadd.s32 1, %s20
      %s37 = scalar_select %p34, %s36, %s20
      %p38 = scmp.ge.s32.totalorder %s37, 2
      %s39 = scalar_select %p38, 0, %s37
      %s40 = ssub.s32 %s20, %s39
      %s41 = ssub.s32 %s22, %s31
      %s42 = sor.u32 %s40, %s41
      %p43 = scmp.eq.s32.totalorder %s42, 0
      %s45 = sadd.s32 %s44, 1
      %s46 = scalar_select %p43, %s44, %s45
      %p49 = pneg %p43
      %p50 = scmp.eq.s32.totalorder %s13, 3
      %p51 = por %p49, %p50
      %p52 = scmp.ne.s32.totalorder %s44, %s47
      %p53 = scmp.eq.s32.totalorder %s13, 0
      %p54 = por %p52, %p53
      %p55 = scmp.ne.s32.totalorder %s44, %s47
      %p56 = scmp.eq.s32.totalorder %s18, 3
      %p57 = por %p55, %p56
      %p58 = scmp.ne.s32.totalorder %s47, %s48
      %p59 = scmp.eq.s32.totalorder %s18, 0
      %p60 = por %p58, %p59
      %p61 = scmp.ne.s32.totalorder %s47, %s48
      %p62 = scmp.eq.s32.totalorder %s19, 3
      %p63 = por %p61, %p62
      %p65 = scmp.ne.s32.totalorder %s48, %s64
      %p66 = scmp.eq.s32.totalorder %s19, 0
      %p67 = por %p65, %p66
      %s68 = ssub.s32 %s22, 1
      %p69 = scmp.gt.s32.totalorder %s68, 0
      %s70 = scalar_select %p69, %s68, 0
      %s71 = ssub.s32 %s31, 1
      %p72 = scmp.gt.s32.totalorder %s71, 0
      %s73 = scalar_select %p72, %s71, 0
      %s74 = ssub.s32 %s20, %s39
      %s75 = ssub.s32 %s70, %s73
      %s76 = sor.u32 %s74, %s75
      %p77 = scmp.eq.s32.totalorder %s76, 0
      %s79 = sadd.s32 %s78, 1
      %s80 = scalar_select %p77, %s78, %s79
      %p83 = pneg %p77
      %p84 = scmp.eq.s32.totalorder %s13, 3
      %p85 = por %p83, %p84
      %p86 = scmp.ne.s32.totalorder %s78, %s81
      %p87 = scmp.eq.s32.totalorder %s13, 0
      %p88 = por %p86, %p87
      %p89 = scmp.ne.s32.totalorder %s78, %s81
      %p90 = scmp.eq.s32.totalorder %s18, 3
      %p91 = por %p89, %p90
      %p92 = scmp.ne.s32.totalorder %s81, %s82
      %p93 = scmp.eq.s32.totalorder %s18, 0
      %p94 = por %p92, %p93
      %p95 = scmp.ne.s32.totalorder %s81, %s82
      %p96 = scmp.eq.s32.totalorder %s19, 3
      %p97 = por %p95, %p96
      %p99 = scmp.ne.s32.totalorder %s82, %s98
      %p100 = scmp.eq.s32.totalorder %s19, 0
      %p101 = por %p99, %p100
      %s102 = ssub.s32 %s21, %s35
      %p103 = scmp.eq.s32.totalorder %s102, 0
      %s105 = sadd.s32 %s104, 1
      %s106 = scalar_select %p103, %s104, %s105
      %p109 = pneg %p103
      %p110 = scmp.eq.s32.totalorder %s13, 3
      %p111 = por %p109, %p110
      %p112 = scmp.ne.s32.totalorder %s104, %s107
      %p113 = scmp.eq.s32.totalorder %s13, 0
      %p114 = por %p112, %p113
      %p115 = scmp.ne.s32.totalorder %s104, %s107
      %p116 = scmp.eq.s32.totalorder %s18, 3
      %p117 = por %p115, %p116
      %p118 = scmp.ne.s32.totalorder %s107, %s108
      %p119 = scmp.eq.s32.totalorder %s18, 0
      %p120 = por %p118, %p119
      %p121 = scmp.ne.s32.totalorder %s107, %s108
      %p122 = scmp.eq.s32.totalorder %s19, 3
      %p123 = por %p121, %p122
      %p125 = scmp.ne.s32.totalorder %s108, %s124
      %p126 = scmp.eq.s32.totalorder %s19, 0
      %p127 = por %p125, %p126
      %s128 = ssub.s32 %s21, %s35
      %p129 = scmp.eq.s32.totalorder %s128, 0
      %s131 = sadd.s32 %s130, 1
      %s132 = scalar_select %p129, %s130, %s131
      %p135 = pneg %p129
      %p136 = scmp.eq.s32.totalorder %s13, 3
      %p137 = por %p135, %p136
      %p138 = scmp.ne.s32.totalorder %s130, %s133
      %p139 = scmp.eq.s32.totalorder %s13, 0
      %p140 = por %p138, %p139
      %p141 = scmp.ne.s32.totalorder %s130, %s133
      %p142 = scmp.eq.s32.totalorder %s18, 3
      %p143 = por %p141, %p142
      %p144 = scmp.ne.s32.totalorder %s133, %s134
      %p145 = scmp.eq.s32.totalorder %s18, 0
      %p146 = por %p144, %p145
      %p147 = scmp.ne.s32.totalorder %s133, %s134
      %p148 = scmp.eq.s32.totalorder %s19, 3
      %p149 = por %p147, %p148
      %p151 = scmp.ne.s32.totalorder %s134, %s150
      %p152 = scmp.eq.s32.totalorder %s19, 0
      %p153 = por %p151, %p152
      %s154 = ssub.s32 %s20, %s39
      %s155 = ssub.s32 %s22, %s31
      %s156 = sor.u32 %s154, %s155
      %s157 = ssub.s32 %s21, %s35
      %s158 = sor.u32 %s156, %s157
      %p159 = scmp.eq.s32.totalorder %s158, 0
      %s161 = sadd.s32 %s160, 1
      %s162 = scalar_select %p159, %s160, %s161
      %p165 = pneg %p159
      %p166 = scmp.eq.s32.totalorder %s13, 3
      %p167 = por %p165, %p166
      %p168 = scmp.ne.s32.totalorder %s160, %s163
      %p169 = scmp.eq.s32.totalorder %s13, 0
      %p170 = por %p168, %p169
      %p171 = scmp.ne.s32.totalorder %s160, %s163
      %p172 = scmp.eq.s32.totalorder %s18, 3
      %p173 = por %p171, %p172
      %p174 = scmp.ne.s32.totalorder %s163, %s164
      %p175 = scmp.eq.s32.totalorder %s18, 0
      %p176 = por %p174, %p175
      %p177 = scmp.ne.s32.totalorder %s163, %s164
      %p178 = scmp.eq.s32.totalorder %s19, 3
      %p179 = por %p177, %p178
      %p181 = scmp.ne.s32.totalorder %s164, %s180
      %p182 = scmp.eq.s32.totalorder %s19, 0
      %p183 = por %p181, %p182
      %p184 = scmp.le.s32.totalorder 1, %s13
      %p185 = scmp.lt.s32.totalorder %s13, 5
      %p186 = pnand %p184, %p185
      %p187 = pneg %p186
      // Predicated region
      $region9: #{tpu_custom_call.1} parent=5 // pred_check
        _
      $region10: #{tpu_custom_call.1} parent=5 // pred_check_branch
        %189 = sbr.rel (%p186) target = $region12
      $region11: #{tpu_custom_call.1} parent=5 // pred_region
        %s190 = ssub.s32 %s13, 1
        // Predicated region
        $region13: #{tpu_custom_call.1} parent=11 // pred_check
          %p191 = pneg %p120
        $region14: #{tpu_custom_call.1} parent=11 // pred_check_branch
          %193 = sbr.rel (%p191) target = $region16
        $region15: #{tpu_custom_call.1} parent=11 // pred_region
          %p194 = scmp.lt.s32.totalorder %s24, 0
          %s195 = scalar_select %p194, %s24, 0
          %s196 = smul.addr %s195, 8
          %s197 = scalar_lea.vmem %s2, %s196
        $region16: #{tpu_custom_call.1} parent=11 // pred_fallthru
          _
        // Predicated region
        $region17: #{tpu_custom_call.1} parent=11 // pred_check
          %p198 = pneg %p146
        $region18: #{tpu_custom_call.1} parent=11 // pred_check_branch
          %200 = sbr.rel (%p198) target = $region20
        $region19: #{tpu_custom_call.1} parent=11 // pred_region
          %p201 = scmp.lt.s32.totalorder %s24, 0
          %s202 = scalar_select %p201, %s24, 0
          %s203 = scalar_lea.vmem %s3, %s202
        $region20: #{tpu_custom_call.1} parent=11 // pred_fallthru
          _
      $region12: #{tpu_custom_call.1} parent=5 // pred_fallthru
        _
      %p204 = scmp.lt.s32.totalorder %s13, 4
      // Predicated region
      $region21: #{tpu_custom_call.1} parent=5 // pred_check
        %p205 = pneg %p204
      $region22: #{tpu_custom_call.1} parent=5 // pred_check_branch
        %207 = sbr.rel (%p205) target = $region24
      $region23: #{tpu_custom_call.1} parent=5 // pred_region
        // Predicated region
        $region25: #{tpu_custom_call.1} parent=23 // pred_check
          %p208 = pneg %p54
        $region26: #{tpu_custom_call.1} parent=23 // pred_check_branch
          %210 = sbr.rel (%p208) target = $region28
        $region27: #{tpu_custom_call.1} parent=23 // pred_region
          %p211 = scmp.lt.s32.totalorder %s20, 1
          %s212 = scalar_select %p211, %s20, 1
          %p213 = scmp.lt.s32.totalorder %s22, 1
          %s214 = scalar_select %p213, %s22, 1
          %s215 = smul.addr %s212, 2
          %s216 = sadd.s32 %s214, %s215
          %s217 = smul.addr %s216, 8
          %s218 = scalar_lea.vmem %s0, %s217
        $region28: #{tpu_custom_call.1} parent=23 // pred_fallthru
          _
        // Predicated region
        $region29: #{tpu_custom_call.1} parent=23 // pred_check
          %p219 = pneg %p88
        $region30: #{tpu_custom_call.1} parent=23 // pred_check_branch
          %221 = sbr.rel (%p219) target = $region32
        $region31: #{tpu_custom_call.1} parent=23 // pred_region
          %s222 = ssub.s32 %s22, 1
          %p223 = scmp.gt.s32.totalorder %s222, 0
          %s224 = scalar_select %p223, %s222, 0
          %p225 = scmp.lt.s32.totalorder %s20, 1
          %s226 = scalar_select %p225, %s20, 1
          %p227 = scmp.lt.s32.totalorder %s224, 1
          %s228 = scalar_select %p227, %s224, 1
          %s229 = smul.addr %s226, 2
          %s230 = sadd.s32 %s228, %s229
          %s231 = smul.addr %s230, 8
          %s232 = scalar_lea.vmem %s1, %s231
          %s233 = ssub.s32 %s22, 1
          %p234 = scmp.gt.s32.totalorder %s233, 0
          %s235 = scalar_select %p234, %s233, 0
        $region32: #{tpu_custom_call.1} parent=23 // pred_fallthru
          _
      $region24: #{tpu_custom_call.1} parent=5 // pred_fallthru
        _
      %p236 = scmp.le.s32.totalorder 1, %s13
      %p237 = scmp.lt.s32.totalorder %s13, 5
      %p238 = pnand %p236, %p237
      %p239 = pneg %p238
      // Predicated region
      $region33: #{tpu_custom_call.1} parent=5 // pred_check
        _
      $region34: #{tpu_custom_call.1} parent=5 // pred_check_branch
        %241 = sbr.rel (%p238) target = $region36
      $region35: #{tpu_custom_call.1} parent=5 // pred_region
        %s242 = ssub.s32 %s13, 1
        %p243 = scmp.lt.s32.totalorder %s23, 1
        %s244 = scalar_select %p243, %s23, 1
        %p245 = scmp.lt.s32.totalorder %s25, 1
        %s246 = scalar_select %p245, %s25, 1
        %s247 = smul.addr %s244, 2
        %s248 = sadd.s32 %s246, %s247
        %s249 = smul.addr %s248, 8
        %s250 = scalar_lea.vmem %s0, %s249
        %p251 = pneg %p60
        %p252 = pneg %p57
        %s253 = ssub.s32 %s25, 1
        %p254 = scmp.gt.s32.totalorder %s253, 0
        %s255 = scalar_select %p254, %s253, 0
        %p256 = scmp.lt.s32.totalorder %s23, 1
        %s257 = scalar_select %p256, %s23, 1
        %p258 = scmp.lt.s32.totalorder %s255, 1
        %s259 = scalar_select %p258, %s255, 1
        %s260 = smul.addr %s257, 2
        %s261 = sadd.s32 %s259, %s260
        %s262 = smul.addr %s261, 8
        %s263 = scalar_lea.vmem %s1, %s262
        %p264 = pneg %p94
        %p265 = pneg %p91
        %p266 = scmp.lt.s32.totalorder %s24, 0
        %s267 = scalar_select %p266, %s24, 0
        %s268 = smul.addr %s267, 8
        %s269 = scalar_lea.vmem %s2, %s268
        %p270 = pneg %p120
        %p271 = pneg %p117
        %p272 = scmp.lt.s32.totalorder %s24, 0
        %s273 = scalar_select %p272, %s24, 0
        %s274 = scalar_lea.vmem %s3, %s273
        %p275 = pneg %p146
        %p276 = pneg %p143
        %p277 = pneg %p176
        %p278 = pneg %p173
        %s279 = sand.u32 %s163, 1
        %s280 = scalar_lea.sflag [#allocation3], %s279
        %s281 = sand.u32 %s163, 1
        %s282 = smul.addr %s281, 8
        %s283 = scalar_lea.vmem [#allocation2], %s282
        %p284 = scmp.lt.s32.totalorder %s23, 1
        %s285 = scalar_select %p284, %s23, 1
        %p286 = scmp.lt.s32.totalorder %s25, 1
        %s287 = scalar_select %p286, %s25, 1
        %s288 = smul.addr %s285, 2
        %s289 = sadd.s32 %s287, %s288
        %s290 = smul.addr %s289, 8
        %s291 = scalar_lea.vmem %s0, %s290
        %s292 = ssub.s32 %s25, 1
        %p293 = scmp.gt.s32.totalorder %s292, 0
        %s294 = scalar_select %p293, %s292, 0
        %p295 = scmp.lt.s32.totalorder %s23, 1
        %s296 = scalar_select %p295, %s23, 1
        %p297 = scmp.lt.s32.totalorder %s294, 1
        %s298 = scalar_select %p297, %s294, 1
        %s299 = smul.addr %s296, 2
        %s300 = sadd.s32 %s298, %s299
        %s301 = smul.addr %s300, 8
        %s302 = scalar_lea.vmem %s1, %s301
        %s303 = ssub.s32 %s25, 1
        %p304 = scmp.gt.s32.totalorder %s303, 0
        %s305 = scalar_select %p304, %s303, 0
        %p306 = scmp.lt.s32.totalorder %s24, 0
        %s307 = scalar_select %p306, %s24, 0
        %s308 = smul.addr %s307, 8
        %s309 = scalar_lea.vmem %s2, %s308
        %p310 = scmp.lt.s32.totalorder %s24, 0
        %s311 = scalar_select %p310, %s24, 0
        %s312 = scalar_lea.vmem %s3, %s311
        %v313 = vld [vmem:[%s291] sm:$0xff]
        %p314 = scmp.gt.s32.totalorder %s25, 0
        %s315 = scalar_select %p314, 1, 0
        %s316 = scvt.s32.f32 %s315
        %v317 = vld [vmem:[%s302] sm:$0xff]
        %v318 = vstv %s316
        %v319 = vmul.f32 %v317, %v318
        %vm322 = vcmask 1040384
        %v323 = vrot.slane %v319, 7
        %v324 = vrot.slane %v313, 7
        %v325 = vsel %vm322, %v323, %v324
        %326 = vrot.lane.b32.xlu0 %v325, 4
        %v327 = vpop.permute.xlu0 %326
        %vm329 = vcmask 1041408
        %v330 = vrot.slane %v319, 6
        %v331 = vrot.slane %v313, 6
        %v332 = vsel %vm329, %v330, %v331
        %333 = vrot.lane.b32.xlu0 %v332, 8
        %v334 = vpop.permute.xlu0 %333
        %vm336 = vcmask 1042432
        %v337 = vrot.slane %v319, 5
        %v338 = vrot.slane %v313, 5
        %v339 = vsel %vm336, %v337, %v338
        %340 = vrot.lane.b32.xlu0 %v339, 12
        %v341 = vpop.permute.xlu0 %340
        %vm343 = vcmask 1043456
        %v344 = vrot.slane %v319, 4
        %v345 = vrot.slane %v313, 4
        %v346 = vsel %vm343, %v344, %v345
        %347 = vrot.lane.b32.xlu0 %v346, 16
        %v348 = vpop.permute.xlu0 %347
        %vm350 = vcmask 31744
        %v351 = vsel %vm350, %v313, %v327
        %vm352 = vcmask 64512
        %v353 = vsel %vm352, %v351, %v334
        %vm354 = vcmask 97280
        %v355 = vsel %vm354, %v353, %v341
        %vm356 = vcmask 130048
        %v357 = vsel %vm356, %v355, %v348
        %v358 = vld [vmem:[%s309] sm:$0xff]
        %v359 = vld [vmem:[%s309 + $0x8] sm:$0xff]
        %v360 = vld [vmem:[%s309 + $0x10] sm:$0xf]
        %v361 = vld [vmem:[%s312] sm:$0x1]
        %v363 = vlaneseq
        %v364 = vshrl.u32 %v363, 7
        %v365 = vsub.s32 0, %v364
        %v366 = vrot.slane %v361, %v365
        %vm368 = vcmask 162816
        %v370 = vsel %vm368, %v357, 0
        %v373 = vsel %vm343, %v360, 0
        %375 = vmatprep.subr.mxu0 0.0
        %376 = vmatpush1.msra.mxu0 %v358
        %377 = vmatprep.subr.mxu0 0.0
        %378 = vmatpush1.msra.mxu0 %v359
        %379 = vmatprep.subr.mxu0 0.0
        %380 = vmatpush1.msra.mxu0 %v373
        %381 = vmatprep.subr.mxu0 0.0
        %382 = vmatpush1.msra.mxu0 0.0
        %383 = vmatprep.subr.mxu0 0.0
        %384 = vmatpush1.msra.mxu0 0.0
        %385 = vmatprep.subr.mxu0 0.0
        %386 = vmatpush1.msra.mxu0 0.0
        %387 = vmatprep.subr.mxu0 0.0
        %388 = vmatpush1.msra.mxu0 0.0
        %389 = vmatprep.subr.mxu0 0.0
        %390 = vmatpush1.msra.mxu0 0.0
        %391 = vmatprep.subr.mxu0 0.0
        %392 = vmatpush1.msra.mxu0 0.0
        %393 = vmatprep.subr.mxu0 0.0
        %394 = vmatpush1.msra.mxu0 0.0
        %395 = vmatprep.subr.mxu0 0.0
        %396 = vmatpush1.msra.mxu0 0.0
        %397 = vmatprep.subr.mxu0 0.0
        %398 = vmatpush1.msra.mxu0 0.0
        %399 = vmatprep.subr.mxu0 0.0
        %400 = vmatpush1.msra.mxu0 0.0
        %401 = vmatprep.subr.mxu0 0.0
        %402 = vmatpush1.msra.mxu0 0.0
        %403 = vmatprep.subr.mxu0 0.0
        %404 = vmatpush1.msra.mxu0 0.0
        %405 = vmatprep.subr.mxu0 0.0
        %406 = vmatpush1.msra.mxu0 0.0
        %407 = vmatprep.subr.mxu0 0.0
        %408 = vmatpush1.msra.mxu0 0.0
        %409 = vmatprep.subr.mxu0 0.0
        %410 = vmatpush1.msra.mxu0 0.0
        %411 = vmatprep.subr.mxu0 0.0
        %412 = vmatpush1.msra.mxu0 0.0
        %413 = vmatprep.subr.mxu0 0.0
        %414 = vmatpush1.msra.mxu0 0.0
        %415 = vmatprep.subr.mxu0 0.0
        %416 = vmatpush1.msra.mxu0 0.0
        %417 = vmatprep.subr.mxu0 0.0
        %418 = vmatpush1.msra.mxu0 0.0
        %419 = vmatprep.subr.mxu0 0.0
        %420 = vmatpush1.msra.mxu0 0.0
        %421 = vmatprep.subr.mxu0 0.0
        %422 = vmatpush1.msra.mxu0 0.0
        %423 = vmatprep.subr.mxu0 0.0
        %424 = vmatpush1.msra.mxu0 0.0
        %425 = vmatprep.subr.mxu0 0.0
        %426 = vmatpush1.msra.mxu0 0.0
        %427 = vmatprep.subr.mxu0 0.0
        %428 = vmatpush1.msra.mxu0 0.0
        %429 = vmatprep.subr.mxu0 0.0
        %430 = vmatpush1.msra.mxu0 0.0
        %431 = vmatprep.subr.mxu0 0.0
        %432 = vmatpush1.msra.mxu0 0.0
        %433 = vmatprep.subr.mxu0 0.0
        %434 = vmatpush1.msra.mxu0 0.0
        %435 = vmatprep.subr.mxu0 0.0
        %436 = vmatpush1.msra.mxu0 0.0
        %437 = vmatprep.subr.mxu0 0.0
        %438 = vmatpush1.msra.mxu0 0.0
        %439 = vmatprep.mubr.f32.mxu0 0.0
        %440 = vmatmul.mubr.f32.gmra.mrb[0].mxu0 %v370
        %v441 = vpop.f32.mrb[0].mxu0
        %v442 = vadd.f32 %v366, %v441
        %v443 = vpop.f32.mrb[0].mxu0
        %444 = vdwg.mxu0
        %445 = vst [vmem:[%s283] sm:$0xff] %v442
        %s446 = sand.u32 %s163, 1
        %s447 = scalar_lea.sflag [#allocation3], %s446
        %s448 = sand.u32 %s163, 1
        %s449 = smul.addr %s448, 8
        %s450 = scalar_lea.vmem [#allocation2], %s449
        // Predicated region
        $region37: #{tpu_custom_call.1} parent=35 // pred_check
          %p451 = pneg %p173
        $region38: #{tpu_custom_call.1} parent=35 // pred_check_branch
          %453 = sbr.rel (%p451) target = $region40
        $region39: #{tpu_custom_call.1} parent=35 // pred_region
          %s455 = ssub.s32 128, 128
          %456 = vsyncadd %s447, %s455
          %s457 = sadd.s32 %s24, %s25
          %s458 = smul.addr %s23, 2
          %s459 = sadd.s32 %s457, %s458
          %s460 = smul.addr %s459, 128
          %s461 = scalar_lea.hbm %s4, %s460
          %s463 = sshll.u32 %s450, 4
          %s464 = int_to_ptr.vmem [resolvable:$true] %s463
          %466 = dma.vmem_to_hbm [thread:$0]  %s464, 128, %s461, %s447
        $region40: #{tpu_custom_call.1} parent=35 // pred_fallthru
          _
      $region36: #{tpu_custom_call.1} parent=5 // pred_fallthru
        _
      %p467 = scmp.le.s32.totalorder 2, %s13
      // Predicated region
      $region41: #{tpu_custom_call.1} parent=5 // pred_check
        %p468 = pneg %p467
      $region42: #{tpu_custom_call.1} parent=5 // pred_check_branch
        %470 = sbr.rel (%p468) target = $region44
      $region43: #{tpu_custom_call.1} parent=5 // pred_region
        %s471 = ssub.s32 %s13, 2
        // Predicated region
        $region45: #{tpu_custom_call.1} parent=43 // pred_check
          %p472 = pneg %p179
        $region46: #{tpu_custom_call.1} parent=43 // pred_check_branch
          %474 = sbr.rel (%p472) target = $region48
        $region47: #{tpu_custom_call.1} parent=43 // pred_region
          %s475 = sand.u32 %s164, 1
          %s476 = scalar_lea.sflag [#allocation3], %s475
          %s477 = sand.u32 %s164, 1
          %s478 = smul.addr %s477, 8
          %s479 = scalar_lea.vmem [#allocation2], %s478
          %480 = dma.done %s476, 128
        $region48: #{tpu_custom_call.1} parent=43 // pred_fallthru
          _
      $region44: #{tpu_custom_call.1} parent=5 // pred_fallthru
        _
    $region6: #{tpu_custom_call.1} parent=1 // loop_footer
      %s17 = sadd.s32 1, %s13
    $region7: #{tpu_custom_call.1} parent=1 // loop_footer_branch
      %12 = sbr.rel target = $region3
    $region8: #{tpu_custom_call.1} parent=1 // loop_exit
      _
    %481 = vsyncpa [#allocation3], 1
    %s482 = scalar_lea.sflag [#allocation3], 1
    %483 = vsyncpa %s482, 1

</llo_original>
